<compile_context>
chip_gen: v7x
topology: tpu7x:2x2x1
jax: 0.10.0
libtpu: 0.0.40
codegen_flags: <defaults>
</compile_context>

<pallas_src>
import jax
import jax.numpy as jnp
from jax.experimental import pallas as pl
from jax.experimental.pallas import tpu as pltpu


def _round_up(x, m):
    return ((x + m - 1) // m) * m


def _critic_kernel(s_ref, a_ref, was_ref, waa_ref, wb1_ref, wb2_ref,
                   wc1_ref, wc2_ref, b_ref, out_ref):
    na = was_ref.shape[1]        # 2*l1p + 2*l2p
    l1p = wb1_ref.shape[0]
    l2p = wb1_ref.shape[1]

    b_a = b_ref[:, 0:na]
    b_b1 = b_ref[:, na:na + l2p]
    b_b2 = b_ref[:, na + l2p:na + 2 * l2p]
    b_c = b_ref[:, na + 2 * l2p:]

    # Stage A: fused layer_1 / layer_4 / layer_2_a / layer_5_a (+ ReLU).
    # sa @ WA == s @ WA[:sd] + a @ WA[sd:]  (no concatenated slab needed).
    s_bf = s_ref[...].astype(jnp.bfloat16)
    a_bf = a_ref[...].astype(jnp.bfloat16)
    z1 = jnp.dot(s_bf, was_ref[...], preferred_element_type=jnp.float32)
    z1 = z1 + jnp.dot(a_bf, waa_ref[...], preferred_element_type=jnp.float32)
    z1 = jnp.maximum(z1 + b_a, 0.0)

    h1 = z1[:, 0:l1p]                     # relu(layer_1([s||a]))
    h2 = z1[:, l1p:2 * l1p]               # relu(layer_4([s||a]))
    a1 = z1[:, 2 * l1p:2 * l1p + l2p]     # relu(layer_2_a(a))
    a2 = z1[:, 2 * l1p + l2p:]            # relu(layer_5_a(a))

    # Stage B: two dense matmuls (layer_2_s, layer_5_s) instead of a
    # block-diagonal one -> half the DMA bytes and half the MXU FLOPs.
    z2a = jnp.dot(h1.astype(jnp.bfloat16), wb1_ref[...],
                  preferred_element_type=jnp.float32)
    z2a = jnp.maximum(z2a + b_b1, 0.0) + a1
    z2b = jnp.dot(h2.astype(jnp.bfloat16), wb2_ref[...],
                  preferred_element_type=jnp.float32)
    z2b = jnp.maximum(z2b + b_b2, 0.0) + a2

    # Stage C: layer_3 / layer_6 have a single output column each, so use a
    # VPU multiply + lane (XLU) reduction instead of an almost-all-zero matmul.
    q1 = jnp.sum(z2a * wc1_ref[...], axis=-1, keepdims=True)
    q2 = jnp.sum(z2b * wc2_ref[...], axis=-1, keepdims=True)

    lane = jax.lax.broadcasted_iota(jnp.int32, out_ref.shape, 1)
    out = jnp.where(lane == 0, q1, jnp.where(lane == 1, q2, 0.0)) + b_c
    out_ref[...] = out.astype(out_ref.dtype)


def init_critic_params(key, state_dim, action_dim, l1=400, l2=300):
    """PyTorch nn.Linear-style uniform init. Weights stored (in_features,
    out_features) (i.e. transposed vs torch), biases as 1-D (out_features,)."""
    def linear(k, fan_in, fan_out):
        kw, kb = jax.random.split(k)
        bound = 1.0 / (fan_in ** 0.5)
        w = jax.random.uniform(kw, (fan_in, fan_out), jnp.float32, -bound, bound)
        b = jax.random.uniform(kb, (fan_out,), jnp.float32, -bound, bound)
        return w, b

    keys = jax.random.split(key, 8)
    sd, ad = state_dim, action_dim
    w1, b1 = linear(keys[0], sd + ad, l1)    # layer_1
    w2s, b2s = linear(keys[1], l1, l2)       # layer_2_s
    w2a, b2a = linear(keys[2], ad, l2)       # layer_2_a
    w3, b3 = linear(keys[3], l2, 1)          # layer_3
    w4, b4 = linear(keys[4], sd + ad, l1)    # layer_4
    w5s, b5s = linear(keys[5], l1, l2)       # layer_5_s
    w5a, b5a = linear(keys[6], ad, l2)       # layer_5_a
    w6, b6 = linear(keys[7], l2, 1)          # layer_6
    return dict(w1=w1, b1=b1, w2s=w2s, b2s=b2s, w2a=w2a, b2a=b2a, w3=w3, b3=b3,
                w4=w4, b4=b4, w5s=w5s, b5s=b5s, w5a=w5a, b5a=b5a, w6=w6, b6=b6)


def pack_critic_params(p, state_dim, action_dim, l1, l2):
    """Pack the 16 Linear params into lane-padded kernel operands.

    Matmul weights (stage A and B) are stored in bfloat16; the tiny stage-C
    rows and the bias row stay float32 (they are used on the VPU)."""
    sd, ad = state_dim, action_dim
    l1p = _round_up(l1, 128)
    l2p = _round_up(l2, 128)
    na = 2 * l1p + 2 * l2p

    # Stage A weight, fused along columns, then split row-wise into the
    # state part and the action part (so s and a never need concatenation).
    wa = jnp.zeros((sd + ad, na), jnp.float32)
    wa = wa.at[:, 0:l1].set(p["w1"])
    wa = wa.at[:, l1p:l1p + l1].set(p["w4"])
    wa = wa.at[sd:, 2 * l1p:2 * l1p + l2].set(p["w2a"])
    wa = wa.at[sd:, 2 * l1p + l2p:2 * l1p + l2p + l2].set(p["w5a"])
    wa_s = wa[:sd].astype(jnp.bfloat16)
    wa_a = wa[sd:].astype(jnp.bfloat16)

    wb1 = jnp.zeros((l1p, l2p), jnp.float32).at[:l1, :l2].set(p["w2s"]).astype(jnp.bfloat16)
    wb2 = jnp.zeros((l1p, l2p), jnp.float32).at[:l1, :l2].set(p["w5s"]).astype(jnp.bfloat16)

    wc1 = jnp.zeros((1, l2p), jnp.float32).at[0, :l2].set(p["w3"][:, 0])
    wc2 = jnp.zeros((1, l2p), jnp.float32).at[0, :l2].set(p["w6"][:, 0])

    nbias = na + 2 * l2p + 128
    bias = jnp.zeros((1, nbias), jnp.float32)
    bias = bias.at[0, 0:l1].set(p["b1"])
    bias = bias.at[0, l1p:l1p + l1].set(p["b4"])
    bias = bias.at[0, 2 * l1p:2 * l1p + l2].set(p["b2a"])
    bias = bias.at[0, 2 * l1p + l2p:2 * l1p + l2p + l2].set(p["b5a"])
    bias = bias.at[0, na:na + l2].set(p["b2s"])
    bias = bias.at[0, na + l2p:na + l2p + l2].set(p["b5s"])
    bias = bias.at[0, na + 2 * l2p + 0].set(p["b3"][0])
    bias = bias.at[0, na + 2 * l2p + 1].set(p["b6"][0])

    return dict(wa_s=wa_s, wa_a=wa_a, wb1=wb1, wb2=wb2, wc1=wc1, wc2=wc2,
                bias=bias)


def critic_forward(s, a, packed, *, batch_tile=512):
    """Pallas twin-Q forward. Returns (q1, q2), each of shape (B, 1) float32."""
    b, sd = s.shape
    ad = a.shape[1]
    na = packed["wa_s"].shape[1]
    l1p, l2p = packed["wb1"].shape
    nc = 128
    nbias = packed["bias"].shape[1]

    bp8 = _round_up(max(b, 8), 8)
    tb = min(bp8, batch_tile)
    bp = _round_up(bp8, tb)
    if bp != b:
        s = jnp.pad(s, ((0, bp - b), (0, 0)))
        a = jnp.pad(a, ((0, bp - b), (0, 0)))

    flops = 2 * bp * ((sd + ad) * na + 2 * l1p * l2p + 2 * l2p)
    bytes_accessed = (4 * bp * (sd + ad)                       # s, a (f32)
                      + 2 * ((sd + ad) * na + 2 * l1p * l2p)   # bf16 weights
                      + 4 * (2 * l2p + nbias)                  # wc rows + bias
                      + 4 * bp * nc)                           # output slab

    tiled = lambda i: (i, 0)
    const = lambda i: (0, 0)

    out = pl.pallas_call(
        _critic_kernel,
        grid=(bp // tb,),
        in_specs=[
            pl.BlockSpec((tb, sd), tiled),        # s
            pl.BlockSpec((tb, ad), tiled),        # a
            pl.BlockSpec((sd, na), const),        # wa_s (bf16)
            pl.BlockSpec((ad, na), const),        # wa_a (bf16)
            pl.BlockSpec((l1p, l2p), const),      # wb1 (bf16)
            pl.BlockSpec((l1p, l2p), const),      # wb2 (bf16)
            pl.BlockSpec((1, l2p), const),        # wc1 (f32)
            pl.BlockSpec((1, l2p), const),        # wc2 (f32)
            pl.BlockSpec((1, nbias), const),      # bias (f32)
        ],
        out_specs=pl.BlockSpec((tb, nc), tiled),
        out_shape=jax.ShapeDtypeStruct((bp, nc), jnp.float32),
        compiler_params=pltpu.CompilerParams(
            dimension_semantics=("parallel",)),
        cost_estimate=pl.CostEstimate(flops=flops, transcendentals=0,
                                      bytes_accessed=bytes_accessed),
    )(s, a, packed["wa_s"], packed["wa_a"], packed["wb1"], packed["wb2"],
      packed["wc1"], packed["wc2"], packed["bias"])

    return out[:b, 0:1], out[:b, 1:2]


def critic_reference(s, a, p):
    """Pure-JAX f32 reference matching the PyTorch forward exactly."""
    sa = jnp.concatenate([s, a], axis=1)
    s1 = jax.nn.relu(sa @ p["w1"] + p["b1"])
    s1 = jax.nn.relu(s1 @ p["w2s"] + p["b2s"])
    a1 = jax.nn.relu(a @ p["w2a"] + p["b2a"])
    q1 = (s1 + a1) @ p["w3"] + p["b3"]
    s2 = jax.nn.relu(sa @ p["w4"] + p["b4"])
    s2 = jax.nn.relu(s2 @ p["w5s"] + p["b5s"])
    a2 = jax.nn.relu(a @ p["w5a"] + p["b5a"])
    q2 = (s2 + a2) @ p["w6"] + p["b6"]
    return q1, q2


if __name__ == "__main__":
    # small, module-consistent shapes
    B, STATE_DIM, ACTION_DIM, L1, L2 = 8, 24, 8, 64, 32

    key = jax.random.PRNGKey(0)
    k_s, k_a, k_p = jax.random.split(key, 3)
    s = jax.random.normal(k_s, (B, STATE_DIM), jnp.float32)
    a = jax.random.normal(k_a, (B, ACTION_DIM), jnp.float32)

    params = init_critic_params(k_p, STATE_DIM, ACTION_DIM, l1=L1, l2=L2)
    packed = pack_critic_params(params, STATE_DIM, ACTION_DIM, L1, L2)

    fwd = jax.jit(critic_forward)
    q1, q2 = jax.block_until_ready(fwd(s, a, packed))

    r1, r2 = critic_reference(s, a, params)
    assert q1.shape == (B, 1) and q2.shape == (B, 1)
    # bf16 MXU inputs (f32 accumulation) -> relaxed tolerance vs the f32 reference.
    assert jnp.allclose(q1, r1, atol=2e-2, rtol=2e-2)
    assert jnp.allclose(q2, r2, atol=2e-2, rtol=2e-2)

    print("KERNEL_OK")
</pallas_src>

<mosaic_0001>
module attributes {stable_mosaic.version = 11 : i64} {
  func.func @_critic_kernel(%arg0: i32, %arg1: memref<8x24xf32, #tpu.memory_space<vmem>>, %arg2: memref<8x8xf32, #tpu.memory_space<vmem>>, %arg3: memref<24x512xbf16, #tpu.memory_space<vmem>>, %arg4: memref<8x512xbf16, #tpu.memory_space<vmem>>, %arg5: memref<128x128xbf16, #tpu.memory_space<vmem>>, %arg6: memref<128x128xbf16, #tpu.memory_space<vmem>>, %arg7: memref<1x128xf32, #tpu.memory_space<vmem>>, %arg8: memref<1x128xf32, #tpu.memory_space<vmem>>, %arg9: memref<1x896xf32, #tpu.memory_space<vmem>>, %arg10: memref<8x128xf32, #tpu.memory_space<vmem>>) attributes {dimension_semantics = [#tpu.dimension_semantics<parallel>], iteration_bounds = array<i64: 1>, scalar_prefetch = 0 : i64, scratch_operands = 0 : i64, tpu.core_type = #tpu.core_type<tc>, window_params = [{transform_indices = @transform_0, window_bounds = array<i64: 8, 24>}, {transform_indices = @transform_1, window_bounds = array<i64: 8, 8>}, {pipeline_mode = #tpu.pipeline_mode<synchronous>, transform_indices = @transform_2, window_bounds = array<i64: 24, 512>}, {pipeline_mode = #tpu.pipeline_mode<synchronous>, transform_indices = @transform_3, window_bounds = array<i64: 8, 512>}, {pipeline_mode = #tpu.pipeline_mode<synchronous>, transform_indices = @transform_4, window_bounds = array<i64: 128, 128>}, {pipeline_mode = #tpu.pipeline_mode<synchronous>, transform_indices = @transform_5, window_bounds = array<i64: 128, 128>}, {pipeline_mode = #tpu.pipeline_mode<synchronous>, transform_indices = @transform_6, window_bounds = array<i64: 1, 128>}, {pipeline_mode = #tpu.pipeline_mode<synchronous>, transform_indices = @transform_7, window_bounds = array<i64: 1, 128>}, {pipeline_mode = #tpu.pipeline_mode<synchronous>, transform_indices = @transform_8, window_bounds = array<i64: 1, 896>}, {transform_indices = @transform_9, window_bounds = array<i64: 8, 128>}]} {
    %c0 = arith.constant 0 : index
    %c0_0 = arith.constant 0 : index
    %0 = vector.load %arg9[%c0, %c0_0] : memref<1x896xf32, #tpu.memory_space<vmem>>, vector<1x512xf32>
    %c0_1 = arith.constant 0 : index
    %c512 = arith.constant 512 : index
    %1 = vector.load %arg9[%c0_1, %c512] : memref<1x896xf32, #tpu.memory_space<vmem>>, vector<1x128xf32>
    %c0_2 = arith.constant 0 : index
    %c640 = arith.constant 640 : index
    %2 = vector.load %arg9[%c0_2, %c640] : memref<1x896xf32, #tpu.memory_space<vmem>>, vector<1x128xf32>
    %c0_3 = arith.constant 0 : index
    %c768 = arith.constant 768 : index
    %3 = vector.load %arg9[%c0_3, %c768] : memref<1x896xf32, #tpu.memory_space<vmem>>, vector<1x128xf32>
    %c0_4 = arith.constant 0 : index
    %c0_5 = arith.constant 0 : index
    %4 = vector.load %arg1[%c0_4, %c0_5] : memref<8x24xf32, #tpu.memory_space<vmem>>, vector<8x24xf32>
    %5 = arith.truncf %4 : vector<8x24xf32> to vector<8x24xbf16>
    %c0_6 = arith.constant 0 : index
    %c0_7 = arith.constant 0 : index
    %6 = vector.load %arg2[%c0_6, %c0_7] : memref<8x8xf32, #tpu.memory_space<vmem>>, vector<8x8xf32>
    %7 = arith.truncf %6 : vector<8x8xf32> to vector<8x8xbf16>
    %c0_8 = arith.constant 0 : index
    %c0_9 = arith.constant 0 : index
    %8 = vector.load %arg3[%c0_8, %c0_9] : memref<24x512xbf16, #tpu.memory_space<vmem>>, vector<24x512xbf16>
    %cst = arith.constant dense<0.000000e+00> : vector<8x512xf32>
    %9 = tpu.matmul %5, %8, %cst {dimension_numbers = #tpu.dot_dimension_numbers<[1], [0], [0], [1], [0, 0, 1, 1], [], []>} : vector<8x24xbf16>, vector<24x512xbf16>, vector<8x512xf32> -> vector<8x512xf32>
    %c0_10 = arith.constant 0 : index
    %c0_11 = arith.constant 0 : index
    %10 = vector.load %arg4[%c0_10, %c0_11] : memref<8x512xbf16, #tpu.memory_space<vmem>>, vector<8x512xbf16>
    %cst_12 = arith.constant dense<0.000000e+00> : vector<8x512xf32>
    %11 = tpu.matmul %7, %10, %cst_12 {dimension_numbers = #tpu.dot_dimension_numbers<[1], [0], [0], [1], [0, 0, 1, 1], [], []>} : vector<8x8xbf16>, vector<8x512xbf16>, vector<8x512xf32> -> vector<8x512xf32>
    %12 = arith.addf %9, %11 : vector<8x512xf32>
    %13 = vector.broadcast %0 : vector<1x512xf32> to vector<8x512xf32>
    %14 = arith.addf %12, %13 : vector<8x512xf32>
    %cst_13 = arith.constant 0.000000e+00 : f32
    %15 = vector.broadcast %cst_13 : f32 to vector<8x512xf32>
    %16 = arith.maximumf %14, %15 : vector<8x512xf32>
    %17 = vector.extract_strided_slice %16 {offsets = [0, 0], sizes = [8, 128], strides = [1, 1]} : vector<8x512xf32> to vector<8x128xf32>
    %18 = vector.extract_strided_slice %16 {offsets = [0, 128], sizes = [8, 128], strides = [1, 1]} : vector<8x512xf32> to vector<8x128xf32>
    %19 = vector.extract_strided_slice %16 {offsets = [0, 256], sizes = [8, 128], strides = [1, 1]} : vector<8x512xf32> to vector<8x128xf32>
    %20 = vector.extract_strided_slice %16 {offsets = [0, 384], sizes = [8, 128], strides = [1, 1]} : vector<8x512xf32> to vector<8x128xf32>
    %21 = arith.truncf %17 : vector<8x128xf32> to vector<8x128xbf16>
    %c0_14 = arith.constant 0 : index
    %c0_15 = arith.constant 0 : index
    %22 = vector.load %arg5[%c0_14, %c0_15] : memref<128x128xbf16, #tpu.memory_space<vmem>>, vector<128x128xbf16>
    %cst_16 = arith.constant dense<0.000000e+00> : vector<8x128xf32>
    %23 = tpu.matmul %21, %22, %cst_16 {dimension_numbers = #tpu.dot_dimension_numbers<[1], [0], [0], [1], [0, 0, 1, 1], [], []>} : vector<8x128xbf16>, vector<128x128xbf16>, vector<8x128xf32> -> vector<8x128xf32>
    %24 = vector.broadcast %1 : vector<1x128xf32> to vector<8x128xf32>
    %25 = arith.addf %23, %24 : vector<8x128xf32>
    %cst_17 = arith.constant 0.000000e+00 : f32
    %26 = vector.broadcast %cst_17 : f32 to vector<8x128xf32>
    %27 = arith.maximumf %25, %26 : vector<8x128xf32>
    %28 = arith.addf %27, %19 : vector<8x128xf32>
    %29 = arith.truncf %18 : vector<8x128xf32> to vector<8x128xbf16>
    %c0_18 = arith.constant 0 : index
    %c0_19 = arith.constant 0 : index
    %30 = vector.load %arg6[%c0_18, %c0_19] : memref<128x128xbf16, #tpu.memory_space<vmem>>, vector<128x128xbf16>
    %cst_20 = arith.constant dense<0.000000e+00> : vector<8x128xf32>
    %31 = tpu.matmul %29, %30, %cst_20 {dimension_numbers = #tpu.dot_dimension_numbers<[1], [0], [0], [1], [0, 0, 1, 1], [], []>} : vector<8x128xbf16>, vector<128x128xbf16>, vector<8x128xf32> -> vector<8x128xf32>
    %32 = vector.broadcast %2 : vector<1x128xf32> to vector<8x128xf32>
    %33 = arith.addf %31, %32 : vector<8x128xf32>
    %cst_21 = arith.constant 0.000000e+00 : f32
    %34 = vector.broadcast %cst_21 : f32 to vector<8x128xf32>
    %35 = arith.maximumf %33, %34 : vector<8x128xf32>
    %36 = arith.addf %35, %20 : vector<8x128xf32>
    %c0_22 = arith.constant 0 : index
    %c0_23 = arith.constant 0 : index
    %37 = vector.load %arg7[%c0_22, %c0_23] : memref<1x128xf32, #tpu.memory_space<vmem>>, vector<1x128xf32>
    %38 = vector.broadcast %37 : vector<1x128xf32> to vector<8x128xf32>
    %39 = arith.mulf %28, %38 : vector<8x128xf32>
    %cst_24 = arith.constant dense<0.000000e+00> : vector<8xf32>
    %40 = vector.multi_reduction <add>, %39, %cst_24 [1] : vector<8x128xf32> to vector<8xf32>
    %41 = vector.shape_cast %40 : vector<8xf32> to vector<8x1xf32>
    %c0_25 = arith.constant 0 : index
    %c0_26 = arith.constant 0 : index
    %42 = vector.load %arg8[%c0_25, %c0_26] : memref<1x128xf32, #tpu.memory_space<vmem>>, vector<1x128xf32>
    %43 = vector.broadcast %42 : vector<1x128xf32> to vector<8x128xf32>
    %44 = arith.mulf %36, %43 : vector<8x128xf32>
    %cst_27 = arith.constant dense<0.000000e+00> : vector<8xf32>
    %45 = vector.multi_reduction <add>, %44, %cst_27 [1] : vector<8x128xf32> to vector<8xf32>
    %46 = vector.shape_cast %45 : vector<8xf32> to vector<8x1xf32>
    %47 = tpu.iota {dimensions = array<i32: 1>} : vector<8x128xi32>
    %c0_i32 = arith.constant 0 : i32
    %48 = vector.broadcast %c0_i32 : i32 to vector<8x128xi32>
    %49 = arith.cmpi eq, %47, %48 : vector<8x128xi32>
    %c1_i32 = arith.constant 1 : i32
    %50 = vector.broadcast %c1_i32 : i32 to vector<8x128xi32>
    %51 = arith.cmpi eq, %47, %50 : vector<8x128xi32>
    %cst_28 = arith.constant 0.000000e+00 : f32
    %52 = vector.shape_cast %46 : vector<8x1xf32> to vector<8x1xf32>
    %53 = vector.broadcast %52 : vector<8x1xf32> to vector<8x128xf32>
    %54 = vector.broadcast %cst_28 : f32 to vector<8x128xf32>
    %55 = arith.select %51, %53, %54 : vector<8x128xi1>, vector<8x128xf32>
    %56 = vector.shape_cast %41 : vector<8x1xf32> to vector<8x1xf32>
    %57 = vector.broadcast %56 : vector<8x1xf32> to vector<8x128xf32>
    %58 = arith.select %49, %57, %55 : vector<8x128xi1>, vector<8x128xf32>
    %59 = vector.broadcast %3 : vector<1x128xf32> to vector<8x128xf32>
    %60 = arith.addf %58, %59 : vector<8x128xf32>
    %c0_29 = arith.constant 0 : index
    %c0_30 = arith.constant 0 : index
    %61 = vector.load %arg10[%c0_29, %c0_30] : memref<8x128xf32, #tpu.memory_space<vmem>>, vector<8x128xf32>
    tpu.vector_store %arg10[%c0_29, %c0_30], %60 {strides = array<i32>} : memref<8x128xf32, #tpu.memory_space<vmem>>, vector<8x128xf32>,
    return
  }
  func.func @transform_0(%arg0: i32) -> (i32, i32) {
    %c0_i32 = arith.constant 0 : i32
    %c0_i32_0 = arith.constant 0 : i32
    return %arg0, %c0_i32 : i32, i32
  }
  func.func @transform_1(%arg0: i32) -> (i32, i32) {
    %c0_i32 = arith.constant 0 : i32
    %c0_i32_0 = arith.constant 0 : i32
    return %arg0, %c0_i32 : i32, i32
  }
  func.func @transform_2(%arg0: i32) -> (i32, i32) {
    %c0_i32 = arith.constant 0 : i32
    %c0_i32_0 = arith.constant 0 : i32
    %c0_i32_1 = arith.constant 0 : i32
    return %c0_i32, %c0_i32_0 : i32, i32
  }
  func.func @transform_3(%arg0: i32) -> (i32, i32) {
    %c0_i32 = arith.constant 0 : i32
    %c0_i32_0 = arith.constant 0 : i32
    %c0_i32_1 = arith.constant 0 : i32
    return %c0_i32, %c0_i32_0 : i32, i32
  }
  func.func @transform_4(%arg0: i32) -> (i32, i32) {
    %c0_i32 = arith.constant 0 : i32
    %c0_i32_0 = arith.constant 0 : i32
    %c0_i32_1 = arith.constant 0 : i32
    return %c0_i32, %c0_i32_0 : i32, i32
  }
  func.func @transform_5(%arg0: i32) -> (i32, i32) {
    %c0_i32 = arith.constant 0 : i32
    %c0_i32_0 = arith.constant 0 : i32
    %c0_i32_1 = arith.constant 0 : i32
    return %c0_i32, %c0_i32_0 : i32, i32
  }
  func.func @transform_6(%arg0: i32) -> (i32, i32) {
    %c0_i32 = arith.constant 0 : i32
    %c0_i32_0 = arith.constant 0 : i32
    %c0_i32_1 = arith.constant 0 : i32
    return %c0_i32, %c0_i32_0 : i32, i32
  }
  func.func @transform_7(%arg0: i32) -> (i32, i32) {
    %c0_i32 = arith.constant 0 : i32
    %c0_i32_0 = arith.constant 0 : i32
    %c0_i32_1 = arith.constant 0 : i32
    return %c0_i32, %c0_i32_0 : i32, i32
  }
  func.func @transform_8(%arg0: i32) -> (i32, i32) {
    %c0_i32 = arith.constant 0 : i32
    %c0_i32_0 = arith.constant 0 : i32
    %c0_i32_1 = arith.constant 0 : i32
    return %c0_i32, %c0_i32_0 : i32, i32
  }
  func.func @transform_9(%arg0: i32) -> (i32, i32) {
    %c0_i32 = arith.constant 0 : i32
    %c0_i32_0 = arith.constant 0 : i32
    return %arg0, %c0_i32 : i32, i32
  }
}

</mosaic_0001>

<llo_original>
// kernel: critic_forward.1
$region0: #{critic_forward.1}
  #allocation0 [shape = 'u32[]', space=smem, size = 0x4, offset = 0x4, fixed_abs, tag = 'smem constant byte address 0x4 - core index']
  #allocation1 [shape = 'u32[144,128]{1,0:T(1,128)}', space=vmem, size = 0x12000, scoped, tag = 'internal scratch']
  %s0 = inlined_call_operand.hbm [shape: f32[8,24], index: 0, kind: input, shape index: {}]
  %s1 = inlined_call_operand.hbm [shape: f32[8,8], index: 1, kind: input, shape index: {}]
  %s2 = inlined_call_operand.hbm [shape: bf16[24,512], index: 2, kind: input, shape index: {}]
  %s3 = inlined_call_operand.hbm [shape: bf16[8,512], index: 3, kind: input, shape index: {}]
  %s4 = inlined_call_operand.hbm [shape: bf16[128,128], index: 4, kind: input, shape index: {}]
  %s5 = inlined_call_operand.hbm [shape: bf16[128,128], index: 5, kind: input, shape index: {}]
  %s6 = inlined_call_operand.vmem [shape: f32[1,128], index: 6, kind: input, shape index: {}]
  %s7 = inlined_call_operand.vmem [shape: f32[1,128], index: 7, kind: input, shape index: {}]
  %s8 = inlined_call_operand.vmem [shape: f32[1,896], index: 8, kind: input, shape index: {}]
  %s9 = inlined_call_operand.vmem [shape: f32[8,128], index: 9, kind: output, shape index: {}]
  %s10 = sld [smem:[#allocation0]]
  $region70: #{critic_forward.1} parent=0
    _
  %s12 = ssub.s32 1, %s10
  %s13 = scalar_select 0, %s12, %s10
  $region1: #{critic_forward.1} parent=0
    #allocation2 [shape = 'u8[4096]{0}', space=vmem, size = 0x1000, scoped, tag = 'input window, operand 0, single buffered']
    #allocation3 [shape = 's32[1]{0}', space=sflag, size = 0x4, scoped, tag = 'scoped memory for critic_forward.1']
    #allocation4 [shape = 'u8[4096]{0}', space=vmem, size = 0x1000, scoped, tag = 'input window, operand 1, single buffered']
    #allocation5 [shape = 's32[1]{0}', space=sflag, size = 0x4, scoped, tag = 'scoped memory for critic_forward.1']
    #allocation6 [shape = 'u8[24576]{0}', space=vmem, size = 0x6000, scoped, tag = 'input window, operand 2, single buffered']
    #allocation7 [shape = 'u8[8192]{0}', space=vmem, size = 0x2000, scoped, tag = 'input window, operand 3, single buffered']
    #allocation8 [shape = 's32[1]{0}', space=sflag, size = 0x4, scoped, tag = 'scoped memory for critic_forward.1']
    #allocation9 [shape = 'u8[32768]{0}', space=vmem, size = 0x8000, scoped, tag = 'input window, operand 4, single buffered']
    #allocation10 [shape = 'u8[32768]{0}', space=vmem, size = 0x8000, scoped, tag = 'input window, operand 5, single buffered']
    #allocation11 [shape = 's32[1]{0}', space=sflag, size = 0x4, scoped, tag = 'scoped memory for critic_forward.1']
    %14 = vsyncpa [#allocation3], 0
    %15 = vsyncpa [#allocation5], 0
    %16 = vsyncpa [#allocation8], 0
    %17 = vsyncpa [#allocation11], 0
    // Predicated region
    $region2: #{critic_forward.1} parent=1 // pred_check
      _
    $region3: #{critic_forward.1} parent=1 // pred_check_branch
      %19 = sbr.rel (0) target = $region5
    $region4: #{critic_forward.1} parent=1 // pred_region
      %s21 = ssub.s32 128, 128
      %22 = vsyncadd [#allocation3], %s21
      %s24 = sshll.u32 [#allocation2], 4
      %s25 = int_to_ptr.vmem [resolvable:$true] %s24
      %27 = dma.hbm_to_vmem [thread:$0]  %s0, 128, %s25, [#allocation3]
    $region5: #{critic_forward.1} parent=1 // pred_fallthru
      _
    // Predicated region
    $region6: #{critic_forward.1} parent=1 // pred_check
      _
    $region7: #{critic_forward.1} parent=1 // pred_check_branch
      %29 = sbr.rel (0) target = $region9
    $region8: #{critic_forward.1} parent=1 // pred_region
      %s31 = ssub.s32 128, 128
      %32 = vsyncadd [#allocation5], %s31
      %s34 = sshll.u32 [#allocation4], 4
      %s35 = int_to_ptr.vmem [resolvable:$true] %s34
      %37 = dma.hbm_to_vmem [thread:$0]  %s1, 128, %s35, [#allocation5]
    $region9: #{critic_forward.1} parent=1 // pred_fallthru
      _
    // Predicated region
    $region10: #{critic_forward.1} parent=1 // pred_check
      _
    $region11: #{critic_forward.1} parent=1 // pred_check_branch
      %39 = sbr.rel (0) target = $region13
    $region12: #{critic_forward.1} parent=1 // pred_region
      %s41 = ssub.s32 768, 768
      %42 = vsyncadd [#allocation5], %s41
      %s43 = sshll.u32 [#allocation6], 4
      %s44 = int_to_ptr.vmem [resolvable:$true] %s43
      %49 = dma.hbm_to_vmem [thread:$0]  %s2, 768, %s44, [#allocation5], 256, 256, 16
    $region13: #{critic_forward.1} parent=1 // pred_fallthru
      _
    // Predicated region
    $region14: #{critic_forward.1} parent=1 // pred_check
      _
    $region15: #{critic_forward.1} parent=1 // pred_check_branch
      %51 = sbr.rel (0) target = $region17
    $region16: #{critic_forward.1} parent=1 // pred_region
      %s53 = ssub.s32 256, 256
      %54 = vsyncadd [#allocation8], %s53
      %s56 = sshll.u32 [#allocation7], 4
      %s57 = int_to_ptr.vmem [resolvable:$true] %s56
      %59 = dma.hbm_to_vmem [thread:$0]  %s3, 256, %s57, [#allocation8]
    $region17: #{critic_forward.1} parent=1 // pred_fallthru
      _
    // Predicated region
    $region18: #{critic_forward.1} parent=1 // pred_check
      _
    $region19: #{critic_forward.1} parent=1 // pred_check_branch
      %61 = sbr.rel (0) target = $region21
    $region20: #{critic_forward.1} parent=1 // pred_region
      %s63 = ssub.s32 1024, 1024
      %64 = vsyncadd [#allocation8], %s63
      %s65 = sshll.u32 [#allocation9], 4
      %s66 = int_to_ptr.vmem [resolvable:$true] %s65
      %71 = dma.hbm_to_vmem [thread:$0]  %s4, 1024, %s66, [#allocation8], 64, 64, 4
    $region21: #{critic_forward.1} parent=1 // pred_fallthru
      _
    // Predicated region
    $region22: #{critic_forward.1} parent=1 // pred_check
      _
    $region23: #{critic_forward.1} parent=1 // pred_check_branch
      %73 = sbr.rel (0) target = $region25
    $region24: #{critic_forward.1} parent=1 // pred_region
      %s75 = ssub.s32 1024, 1024
      %76 = vsyncadd [#allocation11], %s75
      %s77 = sshll.u32 [#allocation10], 4
      %s78 = int_to_ptr.vmem [resolvable:$true] %s77
      %83 = dma.hbm_to_vmem [thread:$0]  %s5, 1024, %s78, [#allocation11], 64, 64, 4
    $region25: #{critic_forward.1} parent=1 // pred_fallthru
      _
    // Predicated region
    $region26: #{critic_forward.1} parent=1 // pred_check
      _
    $region27: #{critic_forward.1} parent=1 // pred_check_branch
      %85 = sbr.rel (0) target = $region29
    $region28: #{critic_forward.1} parent=1 // pred_region
      _
    $region29: #{critic_forward.1} parent=1 // pred_fallthru
      _
    // Predicated region
    $region30: #{critic_forward.1} parent=1 // pred_check
      _
    $region31: #{critic_forward.1} parent=1 // pred_check_branch
      %87 = sbr.rel (0) target = $region33
    $region32: #{critic_forward.1} parent=1 // pred_region
      _
    $region33: #{critic_forward.1} parent=1 // pred_fallthru
      _
    // Predicated region
    $region34: #{critic_forward.1} parent=1 // pred_check
      _
    $region35: #{critic_forward.1} parent=1 // pred_check_branch
      %89 = sbr.rel (0) target = $region37
    $region36: #{critic_forward.1} parent=1 // pred_region
      _
    $region37: #{critic_forward.1} parent=1 // pred_fallthru
      _
    // Predicated region
    $region38: #{critic_forward.1} parent=1 // pred_check
      _
    $region39: #{critic_forward.1} parent=1 // pred_check_branch
      %91 = sbr.rel (0) target = $region41
    $region40: #{critic_forward.1} parent=1 // pred_region
      %92 = dma.done [#allocation3], 128
    $region41: #{critic_forward.1} parent=1 // pred_fallthru
      _
    // Predicated region
    $region42: #{critic_forward.1} parent=1 // pred_check
      _
    $region43: #{critic_forward.1} parent=1 // pred_check_branch
      %94 = sbr.rel (0) target = $region45
    $region44: #{critic_forward.1} parent=1 // pred_region
      %95 = dma.done [#allocation5], 128
    $region45: #{critic_forward.1} parent=1 // pred_fallthru
      _
    // Predicated region
    $region46: #{critic_forward.1} parent=1 // pred_check
      _
    $region47: #{critic_forward.1} parent=1 // pred_check_branch
      %97 = sbr.rel (0) target = $region49
    $region48: #{critic_forward.1} parent=1 // pred_region
      %98 = dma.done [#allocation5], 768
    $region49: #{critic_forward.1} parent=1 // pred_fallthru
      _
    // Predicated region
    $region50: #{critic_forward.1} parent=1 // pred_check
      _
    $region51: #{critic_forward.1} parent=1 // pred_check_branch
      %100 = sbr.rel (0) target = $region53
    $region52: #{critic_forward.1} parent=1 // pred_region
      %101 = dma.done [#allocation8], 256
    $region53: #{critic_forward.1} parent=1 // pred_fallthru
      _
    // Predicated region
    $region54: #{critic_forward.1} parent=1 // pred_check
      _
    $region55: #{critic_forward.1} parent=1 // pred_check_branch
      %103 = sbr.rel (0) target = $region57
    $region56: #{critic_forward.1} parent=1 // pred_region
      %104 = dma.done [#allocation8], 1024
    $region57: #{critic_forward.1} parent=1 // pred_fallthru
      _
    // Predicated region
    $region58: #{critic_forward.1} parent=1 // pred_check
      _
    $region59: #{critic_forward.1} parent=1 // pred_check_branch
      %106 = sbr.rel (0) target = $region61
    $region60: #{critic_forward.1} parent=1 // pred_region
      %107 = dma.done [#allocation11], 1024
    $region61: #{critic_forward.1} parent=1 // pred_fallthru
      _
    %v109 = vld [vmem:[%s8] sm:$0xf]
    %v110 = vld [vmem:[%s8 + $0x4] sm:$0x1]
    %v111 = vld [vmem:[%s8 + $0x5] sm:$0x1]
    %v112 = vld [vmem:[%s8 + $0x6] sm:$0x1]
    %v113 = vld [vmem:[#allocation2] sm:$0xff]
    %v114 = vpack.c.bf16 %v113, %v113
    %v115 = vld [vmem:[#allocation4] sm:$0xff]
    %v116 = vpack.c.bf16 %v115, %v115
    %v117 = vld [vmem:[#allocation6] sm:$0xff]
    %v118 = vld [vmem:[#allocation6 + $0x8] sm:$0xff]
    %v119 = vld [vmem:[#allocation6 + $0x10] sm:$0xff]
    %v120 = vld [vmem:[#allocation6 + $0x18] sm:$0xff]
    %v121 = vld [vmem:[#allocation6 + $0x20] sm:$0xff]
    %v122 = vld [vmem:[#allocation6 + $0x28] sm:$0xff]
    %v123 = vld [vmem:[#allocation7] sm:$0xff]
    %v124 = vld [vmem:[#allocation7 + $0x8] sm:$0xff]
    %v127 = vunpack.c.l.b16 %v123
    %v128 = vunpack.c.h.b16 %v123
    %v129 = vunpack.c.l.b16 %v124
    %v130 = vunpack.c.h.b16 %v124
    %v131 = vpack.c.b16 %v127, %v127
    %v132 = vpack.c.b16 %v128, %v128
    %v133 = vpack.c.b16 %v129, %v129
    %v134 = vpack.c.b16 %v130, %v130
    %vm135 = vcmask 64512
    %v137 = vsel %vm135, %v116, 0
    %vm139 = vcmask 1043456
    %v141 = vsel %vm139, %v131, 0
    %v144 = vsel %vm139, %v132, 0
    %v147 = vsel %vm139, %v133, 0
    %v150 = vsel %vm139, %v134, 0
    %152 = vmatprep.subr.bf16.mxu0 %v144
    %153 = vmatpush1.bf16.msra.mxu0 %v141
    %154 = vmatprep.subr.bf16.mxu0 0
    %155 = vmatpush1.bf16.msra.mxu0 0
    %156 = vmatprep.subr.bf16.mxu0 0
    %157 = vmatpush1.bf16.msra.mxu0 0
    %158 = vmatprep.subr.bf16.mxu0 0
    %159 = vmatpush1.bf16.msra.mxu0 0
    %160 = vmatprep.subr.bf16.mxu0 0
    %161 = vmatpush1.bf16.msra.mxu0 0
    %162 = vmatprep.subr.bf16.mxu0 0
    %163 = vmatpush1.bf16.msra.mxu0 0
    %164 = vmatprep.subr.bf16.mxu0 0
    %165 = vmatpush1.bf16.msra.mxu0 0
    %166 = vmatprep.subr.bf16.mxu0 0
    %167 = vmatpush1.bf16.msra.mxu0 0
    %168 = vmatprep.subr.bf16.mxu0 0
    %169 = vmatpush1.bf16.msra.mxu0 0
    %170 = vmatprep.subr.bf16.mxu0 0
    %171 = vmatpush1.bf16.msra.mxu0 0
    %172 = vmatprep.subr.bf16.mxu0 0
    %173 = vmatpush1.bf16.msra.mxu0 0
    %174 = vmatprep.subr.bf16.mxu0 0
    %175 = vmatpush1.bf16.msra.mxu0 0
    %176 = vmatprep.subr.bf16.mxu0 0
    %177 = vmatpush1.bf16.msra.mxu0 0
    %178 = vmatprep.subr.bf16.mxu0 0
    %179 = vmatpush1.bf16.msra.mxu0 0
    %180 = vmatprep.subr.bf16.mxu0 0
    %181 = vmatpush1.bf16.msra.mxu0 0
    %182 = vmatprep.subr.bf16.mxu0 0
    %183 = vmatpush1.bf16.msra.mxu0 0
    %184 = vmatprep.mubr.bf16.mxu0 0
    %185 = vmatmul.mubr.bf16.gmra.mrb[0].mxu0 %v137
    %v186 = vpop.f32.mrb[0].mxu0
    %v187 = vadd.f32 0.0, %v186
    %v188 = vpop.f32.mrb[0].mxu0
    %v189 = vadd.f32 0.0, %v188
    %v190 = vpop.f32.mrb[0].mxu0
    %v191 = vpop.f32.mrb[0].mxu0
    %192 = vdwg.mxu0
    %193 = vmatprep.subr.bf16.mxu0 %v150
    %194 = vmatpush1.bf16.msra.mxu0 %v147
    %195 = vmatprep.subr.bf16.mxu0 0
    %196 = vmatpush1.bf16.msra.mxu0 0
    %197 = vmatprep.subr.bf16.mxu0 0
    %198 = vmatpush1.bf16.msra.mxu0 0
    %199 = vmatprep.subr.bf16.mxu0 0
    %200 = vmatpush1.bf16.msra.mxu0 0
    %201 = vmatprep.subr.bf16.mxu0 0
    %202 = vmatpush1.bf16.msra.mxu0 0
    %203 = vmatprep.subr.bf16.mxu0 0
    %204 = vmatpush1.bf16.msra.mxu0 0
    %205 = vmatprep.subr.bf16.mxu0 0
    %206 = vmatpush1.bf16.msra.mxu0 0
    %207 = vmatprep.subr.bf16.mxu0 0
    %208 = vmatpush1.bf16.msra.mxu0 0
    %209 = vmatprep.subr.bf16.mxu0 0
    %210 = vmatpush1.bf16.msra.mxu0 0
    %211 = vmatprep.subr.bf16.mxu0 0
    %212 = vmatpush1.bf16.msra.mxu0 0
    %213 = vmatprep.subr.bf16.mxu0 0
    %214 = vmatpush1.bf16.msra.mxu0 0
    %215 = vmatprep.subr.bf16.mxu0 0
    %216 = vmatpush1.bf16.msra.mxu0 0
    %217 = vmatprep.subr.bf16.mxu0 0
    %218 = vmatpush1.bf16.msra.mxu0 0
    %219 = vmatprep.subr.bf16.mxu0 0
    %220 = vmatpush1.bf16.msra.mxu0 0
    %221 = vmatprep.subr.bf16.mxu0 0
    %222 = vmatpush1.bf16.msra.mxu0 0
    %223 = vmatprep.subr.bf16.mxu0 0
    %224 = vmatpush1.bf16.msra.mxu0 0
    %225 = vmatprep.mubr.bf16.mxu0 0
    %226 = vmatmul.mubr.bf16.gmra.mrb[0].mxu0 %v137
    %v227 = vpop.f32.mrb[0].mxu0
    %v228 = vadd.f32 0.0, %v227
    %v229 = vpop.f32.mrb[0].mxu0
    %v230 = vadd.f32 0.0, %v229
    %v231 = vpop.f32.mrb[0].mxu0
    %v232 = vpop.f32.mrb[0].mxu0
    %233 = vdwg.mxu0
    %v240 = vunpack.c.l.b16 %v117
    %v241 = vunpack.c.h.b16 %v117
    %v242 = vunpack.c.l.b16 %v118
    %v243 = vunpack.c.h.b16 %v118
    %v244 = vunpack.c.l.b16 %v119
    %v245 = vunpack.c.h.b16 %v119
    %v246 = vunpack.c.l.b16 %v120
    %v247 = vunpack.c.h.b16 %v120
    %v248 = vunpack.c.l.b16 %v121
    %v249 = vunpack.c.h.b16 %v121
    %v250 = vunpack.c.l.b16 %v122
    %v251 = vunpack.c.h.b16 %v122
    %v252 = vpack.c.b16 %v244, %v240
    %v253 = vpack.c.b16 %v245, %v241
    %v254 = vpack.c.b16 %v246, %v242
    %v255 = vpack.c.b16 %v247, %v243
    %v256 = vpack.c.b16 %v248, %v248
    %v257 = vpack.c.b16 %v249, %v249
    %v258 = vpack.c.b16 %v250, %v250
    %v259 = vpack.c.b16 %v251, %v251
    %vm264 = vcmask 195584
    %v266 = vsel %vm264, %v114, 0
    %v269 = vsel %vm139, %v256, 0
    %v272 = vsel %vm139, %v257, 0
    %v275 = vsel %vm139, %v258, 0
    %v278 = vsel %vm139, %v259, 0
    %280 = vmatprep.subr.bf16.mxu0 %v253
    %281 = vmatpush1.bf16.msra.mxu0 %v252
    %282 = vmatprep.subr.bf16.mxu0 %v272
    %283 = vmatpush1.bf16.msra.mxu0 %v269
    %284 = vmatprep.subr.bf16.mxu0 0
    %285 = vmatpush1.bf16.msra.mxu0 0
    %286 = vmatprep.subr.bf16.mxu0 0
    %287 = vmatpush1.bf16.msra.mxu0 0
    %288 = vmatprep.subr.bf16.mxu0 0
    %289 = vmatpush1.bf16.msra.mxu0 0
    %290 = vmatprep.subr.bf16.mxu0 0
    %291 = vmatpush1.bf16.msra.mxu0 0
    %292 = vmatprep.subr.bf16.mxu0 0
    %293 = vmatpush1.bf16.msra.mxu0 0
    %294 = vmatprep.subr.bf16.mxu0 0
    %295 = vmatpush1.bf16.msra.mxu0 0
    %296 = vmatprep.subr.bf16.mxu0 0
    %297 = vmatpush1.bf16.msra.mxu0 0
    %298 = vmatprep.subr.bf16.mxu0 0
    %299 = vmatpush1.bf16.msra.mxu0 0
    %300 = vmatprep.subr.bf16.mxu0 0
    %301 = vmatpush1.bf16.msra.mxu0 0
    %302 = vmatprep.subr.bf16.mxu0 0
    %303 = vmatpush1.bf16.msra.mxu0 0
    %304 = vmatprep.subr.bf16.mxu0 0
    %305 = vmatpush1.bf16.msra.mxu0 0
    %306 = vmatprep.subr.bf16.mxu0 0
    %307 = vmatpush1.bf16.msra.mxu0 0
    %308 = vmatprep.subr.bf16.mxu0 0
    %309 = vmatpush1.bf16.msra.mxu0 0
    %310 = vmatprep.subr.bf16.mxu0 0
    %311 = vmatpush1.bf16.msra.mxu0 0
    %312 = vmatprep.mubr.bf16.mxu0 0
    %313 = vmatmul.mubr.bf16.gmra.mrb[0].mxu0 %v266
    %v314 = vpop.f32.mrb[0].mxu0
    %v315 = vadd.f32 %v187, %v314
    %v316 = vpop.f32.mrb[0].mxu0
    %v317 = vadd.f32 %v189, %v316
    %v318 = vpop.f32.mrb[0].mxu0
    %v319 = vpop.f32.mrb[0].mxu0
    %320 = vdwg.mxu0
    %321 = vmatprep.subr.bf16.mxu0 %v255
    %322 = vmatpush1.bf16.msra.mxu0 %v254
    %323 = vmatprep.subr.bf16.mxu0 %v278
    %324 = vmatpush1.bf16.msra.mxu0 %v275
    %325 = vmatprep.subr.bf16.mxu0 0
    %326 = vmatpush1.bf16.msra.mxu0 0
    %327 = vmatprep.subr.bf16.mxu0 0
    %328 = vmatpush1.bf16.msra.mxu0 0
    %329 = vmatprep.subr.bf16.mxu0 0
    %330 = vmatpush1.bf16.msra.mxu0 0
    %331 = vmatprep.subr.bf16.mxu0 0
    %332 = vmatpush1.bf16.msra.mxu0 0
    %333 = vmatprep.subr.bf16.mxu0 0
    %334 = vmatpush1.bf16.msra.mxu0 0
    %335 = vmatprep.subr.bf16.mxu0 0
    %336 = vmatpush1.bf16.msra.mxu0 0
    %337 = vmatprep.subr.bf16.mxu0 0
    %338 = vmatpush1.bf16.msra.mxu0 0
    %339 = vmatprep.subr.bf16.mxu0 0
    %340 = vmatpush1.bf16.msra.mxu0 0
    %341 = vmatprep.subr.bf16.mxu0 0
    %342 = vmatpush1.bf16.msra.mxu0 0
    %343 = vmatprep.subr.bf16.mxu0 0
    %344 = vmatpush1.bf16.msra.mxu0 0
    %345 = vmatprep.subr.bf16.mxu0 0
    %346 = vmatpush1.bf16.msra.mxu0 0
    %347 = vmatprep.subr.bf16.mxu0 0
    %348 = vmatpush1.bf16.msra.mxu0 0
    %349 = vmatprep.subr.bf16.mxu0 0
    %350 = vmatpush1.bf16.msra.mxu0 0
    %351 = vmatprep.subr.bf16.mxu0 0
    %352 = vmatpush1.bf16.msra.mxu0 0
    %353 = vmatprep.mubr.bf16.mxu0 0
    %354 = vmatmul.mubr.bf16.gmra.mrb[0].mxu0 %v266
    %v355 = vpop.f32.mrb[0].mxu0
    %v356 = vadd.f32 %v228, %v355
    %v357 = vpop.f32.mrb[0].mxu0
    %v358 = vadd.f32 %v230, %v357
    %v359 = vpop.f32.mrb[0].mxu0
    %v360 = vpop.f32.mrb[0].mxu0
    %361 = vdwg.mxu0
    %v363 = vlaneseq
    %v364 = vshrl.u32 %v363, 7
    %v365 = vsub.s32 0, %v364
    %v366 = vrot.slane %v109, %v365
    %v367 = vlaneseq
    %v368 = vshrl.u32 %v367, 7
    %v369 = vsub.s32 1, %v368
    %v370 = vrot.slane %v109, %v369
    %v371 = vlaneseq
    %v372 = vshrl.u32 %v371, 7
    %v373 = vsub.s32 2, %v372
    %v374 = vrot.slane %v109, %v373
    %v375 = vlaneseq
    %v376 = vshrl.u32 %v375, 7
    %v377 = vsub.s32 3, %v376
    %v378 = vrot.slane %v109, %v377
    %v383 = vadd.f32 %v315, %v366
    %v384 = vadd.f32 %v317, %v370
    %v385 = vadd.f32 %v356, %v374
    %v386 = vadd.f32 %v358, %v378
    %v387 = vmax.f32 %v383, 0.0
    %v388 = vmax.f32 %v384, 0.0
    %v389 = vmax.f32 %v385, 0.0
    %v390 = vmax.f32 %v386, 0.0
    %v391 = vpack.c.bf16 %v387, %v387
    %v392 = vld [vmem:[#allocation9] sm:$0xf]
    %v393 = vld [vmem:[#allocation9 + $0x4] sm:$0xf]
    %v394 = vld [vmem:[#allocation9 + $0x8] sm:$0xf]
    %v395 = vld [vmem:[#allocation9 + $0xc] sm:$0xf]
    %v396 = vld [vmem:[#allocation9 + $0x10] sm:$0xf]
    %v397 = vld [vmem:[#allocation9 + $0x14] sm:$0xf]
    %v398 = vld [vmem:[#allocation9 + $0x18] sm:$0xf]
    %v399 = vld [vmem:[#allocation9 + $0x1c] sm:$0xf]
    %v400 = vld [vmem:[#allocation9 + $0x20] sm:$0xf]
    %v401 = vld [vmem:[#allocation9 + $0x24] sm:$0xf]
    %v402 = vld [vmem:[#allocation9 + $0x28] sm:$0xf]
    %v403 = vld [vmem:[#allocation9 + $0x2c] sm:$0xf]
    %v404 = vld [vmem:[#allocation9 + $0x30] sm:$0xf]
    %v405 = vld [vmem:[#allocation9 + $0x34] sm:$0xf]
    %v406 = vld [vmem:[#allocation9 + $0x38] sm:$0xf]
    %v407 = vld [vmem:[#allocation9 + $0x3c] sm:$0xf]
    %v409 = vlaneseq
    %v410 = vshrl.u32 %v409, 7
    %v411 = vsub.s32 0, %v410
    %v412 = vrot.slane %v110, %v411
    %v430 = vunpack.c.l.b16 %v392
    %v431 = vunpack.c.l.b16 %v393
    %v432 = vunpack.c.l.b16 %v394
    %v433 = vunpack.c.l.b16 %v395
    %v434 = vunpack.c.l.b16 %v396
    %v435 = vunpack.c.l.b16 %v397
    %v436 = vunpack.c.l.b16 %v398
    %v437 = vunpack.c.l.b16 %v399
    %v438 = vunpack.c.l.b16 %v400
    %v439 = vunpack.c.l.b16 %v401
    %v440 = vunpack.c.l.b16 %v402
    %v441 = vunpack.c.l.b16 %v403
    %v442 = vunpack.c.l.b16 %v404
    %v443 = vunpack.c.l.b16 %v405
    %v444 = vunpack.c.l.b16 %v406
    %v445 = vunpack.c.l.b16 %v407
    %v446 = vpack.c.b16 %v431, %v430
    %v447 = vpack.c.b16 %v433, %v432
    %v448 = vpack.c.b16 %v435, %v434
    %v449 = vpack.c.b16 %v437, %v436
    %v450 = vpack.c.b16 %v439, %v438
    %v451 = vpack.c.b16 %v441, %v440
    %v452 = vpack.c.b16 %v443, %v442
    %v453 = vpack.c.b16 %v445, %v444
    %462 = vmatprep.subr.bf16.mxu0 0
    %463 = vmatpush1.bf16.msra.mxu0 %v446
    %464 = vmatprep.subr.bf16.mxu0 0
    %465 = vmatpush1.bf16.msra.mxu0 %v447
    %466 = vmatprep.subr.bf16.mxu0 0
    %467 = vmatpush1.bf16.msra.mxu0 %v448
    %468 = vmatprep.subr.bf16.mxu0 0
    %469 = vmatpush1.bf16.msra.mxu0 %v449
    %470 = vmatprep.subr.bf16.mxu0 0
    %471 = vmatpush1.bf16.msra.mxu0 %v450
    %472 = vmatprep.subr.bf16.mxu0 0
    %473 = vmatpush1.bf16.msra.mxu0 %v451
    %474 = vmatprep.subr.bf16.mxu0 0
    %475 = vmatpush1.bf16.msra.mxu0 %v452
    %476 = vmatprep.subr.bf16.mxu0 0
    %477 = vmatpush1.bf16.msra.mxu0 %v453
    %478 = vmatprep.subr.bf16.mxu0 0
    %479 = vmatpush1.bf16.msra.mxu0 0
    %480 = vmatprep.subr.bf16.mxu0 0
    %481 = vmatpush1.bf16.msra.mxu0 0
    %482 = vmatprep.subr.bf16.mxu0 0
    %483 = vmatpush1.bf16.msra.mxu0 0
    %484 = vmatprep.subr.bf16.mxu0 0
    %485 = vmatpush1.bf16.msra.mxu0 0
    %486 = vmatprep.subr.bf16.mxu0 0
    %487 = vmatpush1.bf16.msra.mxu0 0
    %488 = vmatprep.subr.bf16.mxu0 0
    %489 = vmatpush1.bf16.msra.mxu0 0
    %490 = vmatprep.subr.bf16.mxu0 0
    %491 = vmatpush1.bf16.msra.mxu0 0
    %492 = vmatprep.subr.bf16.mxu0 0
    %493 = vmatpush1.bf16.msra.mxu0 0
    %494 = vmatprep.mubr.bf16.mxu0 0
    %495 = vmatmul.mubr.bf16.gmra.mrb[0].mxu0 %v391
    %v496 = vpop.f32.mrb[0].mxu0
    %v497 = vadd.f32 %v412, %v496
    %v498 = vpop.f32.mrb[0].mxu0
    %v499 = vpop.f32.mrb[0].mxu0
    %v500 = vpop.f32.mrb[0].mxu0
    %501 = vdwg.mxu0
    %v502 = vmax.f32 %v497, 0.0
    %v503 = vadd.f32 %v502, %v389
    %v504 = vpack.c.bf16 %v388, %v388
    %v505 = vld [vmem:[#allocation10] sm:$0xf]
    %v506 = vld [vmem:[#allocation10 + $0x4] sm:$0xf]
    %v507 = vld [vmem:[#allocation10 + $0x8] sm:$0xf]
    %v508 = vld [vmem:[#allocation10 + $0xc] sm:$0xf]
    %v509 = vld [vmem:[#allocation10 + $0x10] sm:$0xf]
    %v510 = vld [vmem:[#allocation10 + $0x14] sm:$0xf]
    %v511 = vld [vmem:[#allocation10 + $0x18] sm:$0xf]
    %v512 = vld [vmem:[#allocation10 + $0x1c] sm:$0xf]
    %v513 = vld [vmem:[#allocation10 + $0x20] sm:$0xf]
    %v514 = vld [vmem:[#allocation10 + $0x24] sm:$0xf]
    %v515 = vld [vmem:[#allocation10 + $0x28] sm:$0xf]
    %v516 = vld [vmem:[#allocation10 + $0x2c] sm:$0xf]
    %v517 = vld [vmem:[#allocation10 + $0x30] sm:$0xf]
    %v518 = vld [vmem:[#allocation10 + $0x34] sm:$0xf]
    %v519 = vld [vmem:[#allocation10 + $0x38] sm:$0xf]
    %v520 = vld [vmem:[#allocation10 + $0x3c] sm:$0xf]
    %v522 = vlaneseq
    %v523 = vshrl.u32 %v522, 7
    %v524 = vsub.s32 0, %v523
    %v525 = vrot.slane %v111, %v524
    %v543 = vunpack.c.l.b16 %v505
    %v544 = vunpack.c.l.b16 %v506
    %v545 = vunpack.c.l.b16 %v507
    %v546 = vunpack.c.l.b16 %v508
    %v547 = vunpack.c.l.b16 %v509
    %v548 = vunpack.c.l.b16 %v510
    %v549 = vunpack.c.l.b16 %v511
    %v550 = vunpack.c.l.b16 %v512
    %v551 = vunpack.c.l.b16 %v513
    %v552 = vunpack.c.l.b16 %v514
    %v553 = vunpack.c.l.b16 %v515
    %v554 = vunpack.c.l.b16 %v516
    %v555 = vunpack.c.l.b16 %v517
    %v556 = vunpack.c.l.b16 %v518
    %v557 = vunpack.c.l.b16 %v519
    %v558 = vunpack.c.l.b16 %v520
    %v559 = vpack.c.b16 %v544, %v543
    %v560 = vpack.c.b16 %v546, %v545
    %v561 = vpack.c.b16 %v548, %v547
    %v562 = vpack.c.b16 %v550, %v549
    %v563 = vpack.c.b16 %v552, %v551
    %v564 = vpack.c.b16 %v554, %v553
    %v565 = vpack.c.b16 %v556, %v555
    %v566 = vpack.c.b16 %v558, %v557
    %575 = vmatprep.subr.bf16.mxu0 0
    %576 = vmatpush1.bf16.msra.mxu0 %v559
    %577 = vmatprep.subr.bf16.mxu0 0
    %578 = vmatpush1.bf16.msra.mxu0 %v560
    %579 = vmatprep.subr.bf16.mxu0 0
    %580 = vmatpush1.bf16.msra.mxu0 %v561
    %581 = vmatprep.subr.bf16.mxu0 0
    %582 = vmatpush1.bf16.msra.mxu0 %v562
    %583 = vmatprep.subr.bf16.mxu0 0
    %584 = vmatpush1.bf16.msra.mxu0 %v563
    %585 = vmatprep.subr.bf16.mxu0 0
    %586 = vmatpush1.bf16.msra.mxu0 %v564
    %587 = vmatprep.subr.bf16.mxu0 0
    %588 = vmatpush1.bf16.msra.mxu0 %v565
    %589 = vmatprep.subr.bf16.mxu0 0
    %590 = vmatpush1.bf16.msra.mxu0 %v566
    %591 = vmatprep.subr.bf16.mxu0 0
    %592 = vmatpush1.bf16.msra.mxu0 0
    %593 = vmatprep.subr.bf16.mxu0 0
    %594 = vmatpush1.bf16.msra.mxu0 0
    %595 = vmatprep.subr.bf16.mxu0 0
    %596 = vmatpush1.bf16.msra.mxu0 0
    %597 = vmatprep.subr.bf16.mxu0 0
    %598 = vmatpush1.bf16.msra.mxu0 0
    %599 = vmatprep.subr.bf16.mxu0 0
    %600 = vmatpush1.bf16.msra.mxu0 0
    %601 = vmatprep.subr.bf16.mxu0 0
    %602 = vmatpush1.bf16.msra.mxu0 0
    %603 = vmatprep.subr.bf16.mxu0 0
    %604 = vmatpush1.bf16.msra.mxu0 0
    %605 = vmatprep.subr.bf16.mxu0 0
    %606 = vmatpush1.bf16.msra.mxu0 0
    %607 = vmatprep.mubr.bf16.mxu0 0
    %608 = vmatmul.mubr.bf16.gmra.mrb[0].mxu0 %v504
    %v609 = vpop.f32.mrb[0].mxu0
    %v610 = vadd.f32 %v525, %v609
    %v611 = vpop.f32.mrb[0].mxu0
    %v612 = vpop.f32.mrb[0].mxu0
    %v613 = vpop.f32.mrb[0].mxu0
    %614 = vdwg.mxu0
    %v615 = vmax.f32 %v610, 0.0
    %v616 = vadd.f32 %v615, %v390
    %v617 = vld [vmem:[%s6] sm:$0x1]
    %v619 = vlaneseq
    %v620 = vshrl.u32 %v619, 7
    %v621 = vsub.s32 0, %v620
    %v622 = vrot.slane %v617, %v621
    %v624 = vmul.f32 %v503, %v622
    %625 = vadd.xlane.f32.xlu0 %v624
    %v626 = vpop.xlane.xlu0 %625
    %v627 = vld [vmem:[%s7] sm:$0x1]
    %v629 = vlaneseq
    %v630 = vshrl.u32 %v629, 7
    %v631 = vsub.s32 0, %v630
    %v632 = vrot.slane %v627, %v631
    %v634 = vmul.f32 %v616, %v632
    %635 = vadd.xlane.f32.xlu0 %v634
    %v636 = vpop.xlane.xlu0 %635
    %v637 = vlaneseq
    %v638 = vand.u32 %v637, 127
    %vm639 = vcmp.eq.s32.totalorder %v638, 0
    %vm640 = vcmp.eq.s32.totalorder %v638, 1
    %v641 = vsel %vm640, %v636, 0.0
    %v642 = vsel %vm639, %v626, %v641
    %v644 = vlaneseq
    %v645 = vshrl.u32 %v644, 7
    %v646 = vsub.s32 0, %v645
    %v647 = vrot.slane %v112, %v646
    %v649 = vadd.f32 %v642, %v647
    %650 = vst [vmem:[%s9] sm:$0xff] %v649
    // Predicated region
    $region62: #{critic_forward.1} parent=1 // pred_check
      _
    $region63: #{critic_forward.1} parent=1 // pred_check_branch
      %652 = sbr.rel (0) target = $region65
    $region64: #{critic_forward.1} parent=1 // pred_region
      _
    $region65: #{critic_forward.1} parent=1 // pred_fallthru
      _
    // Predicated region
    $region66: #{critic_forward.1} parent=1 // pred_check
      _
    $region67: #{critic_forward.1} parent=1 // pred_check_branch
      %654 = sbr.rel (0) target = $region69
    $region68: #{critic_forward.1} parent=1 // pred_region
      _
    $region69: #{critic_forward.1} parent=1 // pred_fallthru
      _
    %655 = vsyncpa [#allocation3], 1
    %656 = vsyncpa [#allocation5], 1
    %657 = vsyncpa [#allocation8], 1
    %658 = vsyncpa [#allocation11], 1

</llo_original>
